<compile_context>
chip_gen: v7x
topology: tpu7x:2x2x1
jax: 0.10.0
libtpu: 0.0.40
codegen_flags: <defaults>
</compile_context>

<pallas_src>
import math
from functools import partial

import jax
import jax.numpy as jnp
from jax.experimental import pallas as pl
from jax.experimental.pallas import tpu as pltpu


def _round_up(x: int, m: int) -> int:
    return ((x + m - 1) // m) * m


def _vmem_block_bytes(shape, itemsize) -> int:
    """Approx VMEM bytes of one block buffer (last dim padded to 128 lanes,
    second-to-last to 8 sublanes)."""
    dims = list(shape)
    dims[-1] = _round_up(dims[-1], 128)
    if len(dims) >= 2:
        dims[-2] = _round_up(dims[-2], 8)
    n = 1
    for d in dims:
        n *= d
    return n * itemsize


_VMEM_BUDGET = 32 * 1024 * 1024          # headroom under v7x's 64 MiB physical VMEM
_VMEM_LIMIT_BYTES = 48 * 1024 * 1024     # > v5e's 16 MiB scoped default, < v7x's 64 MiB


def _pick_chunk_tile(batch, num_chunks, num_lead, chunk_len, d_model,
                     x_itemsize, w_itemsize, out_itemsize):
    """Pick the per-step chunk-row tile size (tc)."""

    def footprint(tc):
        return (2 * _vmem_block_bytes((1, num_lead, tc, chunk_len), x_itemsize)
                + 2 * _vmem_block_bytes((1, tc, d_model), out_itemsize)
                + 2 * _vmem_block_bytes((num_lead, chunk_len, d_model), w_itemsize)
                + 2 * _vmem_block_bytes((1, d_model), 4))

    # Mem-bound GEMM: per-step overhead (~0.35us) must stay small relative to
    # the per-step DMA, so take the biggest tile that fits VMEM.  Tiles smaller
    # than num_chunks must be multiples of 8 (sublane constraint).
    tc = min(num_chunks, 1024)
    if tc < num_chunks:
        tc = max(8, (tc // 8) * 8)
    while footprint(tc) > _VMEM_BUDGET and tc > 8:
        tc = max(8, ((tc // 2) // 8) * 8)
    assert footprint(tc) <= _VMEM_BUDGET, (
        "d_model too large for a resident weight"
        "  # TODO(synk): N-tiled fallback for very large d_model")

    # v7x has 2 TensorCores fed by sharding "parallel" grid axes: make sure the
    # grid has at least 2 steps whenever the problem allows it.
    if batch * pl.cdiv(num_chunks, tc) < 2 and num_chunks > 8:
        tc = _round_up(pl.cdiv(num_chunks, 2), 8)
    return tc


@partial(jax.jit, static_argnames=("compute_dtype", "out_dtype"))
def linear_embed_forward(x, w3, bias2, *, compute_dtype=jnp.float32,
                         out_dtype=jnp.float32):
    """Fused chunking + linear embed.

    x:     (batch, num_lead, seqlen)        native PyTorch layout
    w3:    (num_lead, chunk_len, d_model)   nn.Linear weight, reshaped
    bias2: (1, d_model)                     f32, added post-accumulation
    Returns (batch, num_chunks, d_model) in out_dtype (f32 MXU accumulation).
    """
    batch, num_lead, seqlen = x.shape
    _, chunk_len, d_model = w3.shape
    assert seqlen % chunk_len == 0
    num_chunks = seqlen // chunk_len

    # Free dim-split reshape (seqlen -> num_chunks x chunk_len); the permute of
    # the PyTorch module is absorbed into the kernel's per-lead contraction.
    x4 = x.reshape(batch, num_lead, num_chunks, chunk_len)

    tc = _pick_chunk_tile(batch, num_chunks, num_lead, chunk_len, d_model,
                          x4.dtype.itemsize, w3.dtype.itemsize,
                          jnp.dtype(out_dtype).itemsize)
    grid = (batch, pl.cdiv(num_chunks, tc))

    def kernel(x_ref, w_ref, b_ref, o_ref):
        # x_ref: (1, num_lead, tc, chunk_len)   one batch element, all leads
        # w_ref: (num_lead, chunk_len, d_model) resident across the whole grid
        # b_ref: (1, d_model)                   resident across the whole grid
        # o_ref: (1, tc, d_model)
        acc = None
        for lead in range(num_lead):              # static unroll, num_lead is small
            lhs = x_ref[0, lead]                  # (tc, chunk_len)
            if lhs.dtype != compute_dtype:
                lhs = lhs.astype(compute_dtype)   # in-kernel cast: no extra HBM pass
            p = jnp.dot(lhs, w_ref[lead], preferred_element_type=jnp.float32)
            acc = p if acc is None else acc + p
        o_ref[0] = (acc + b_ref[...].astype(jnp.float32)).astype(o_ref.dtype)

    m_total = batch * num_chunks
    k_total = num_lead * chunk_len
    cost = pl.CostEstimate(
        flops=2 * m_total * k_total * d_model,
        transcendentals=0,
        bytes_accessed=(x4.size * x4.dtype.itemsize
                        + w3.size * w3.dtype.itemsize
                        + bias2.size * bias2.dtype.itemsize
                        + m_total * d_model * jnp.dtype(out_dtype).itemsize),
    )

    return pl.pallas_call(
        kernel,
        out_shape=jax.ShapeDtypeStruct((batch, num_chunks, d_model), out_dtype),
        grid_spec=pltpu.PrefetchScalarGridSpec(
            num_scalar_prefetch=0,
            grid=grid,
            in_specs=[
                # x: one batch element, all leads, a tile of chunks.
                pl.BlockSpec((1, num_lead, tc, chunk_len),
                             lambda b, c: (b, 0, c, 0)),
                # weight / bias: constant block index -> fetched once, resident.
                pl.BlockSpec((num_lead, chunk_len, d_model),
                             lambda b, c: (0, 0, 0)),
                pl.BlockSpec((1, d_model), lambda b, c: (0, 0)),
            ],
            out_specs=pl.BlockSpec((1, tc, d_model), lambda b, c: (b, c, 0)),
        ),
        compiler_params=pltpu.CompilerParams(
            dimension_semantics=("parallel", "parallel"),
            vmem_limit_bytes=_VMEM_LIMIT_BYTES,
        ),
        cost_estimate=cost,
    )(x4, w3, bias2)


class LinearEmbed:
    """JAX/Pallas port of the PyTorch LinearEmbed module."""

    def __init__(self, num_lead: int, chunk_len: int, d_model: int, key,
                 *, compute_dtype=jnp.float32):
        self.num_lead = num_lead
        self.chunk_len = chunk_len
        self.d_model = d_model
        self.compute_dtype = compute_dtype
        chunk_dim = num_lead * chunk_len

        # Deterministic init mimicking torch.nn.Linear (uniform +/- 1/sqrt(fan_in)).
        kw, kb = jax.random.split(key)
        bound = 1.0 / math.sqrt(chunk_dim)
        weight = jax.random.uniform(kw, (chunk_dim, d_model), jnp.float32, -bound, bound)
        bias = jax.random.uniform(kb, (d_model,), jnp.float32, -bound, bound)

        # Stored as (num_lead, chunk_len, d_model): row l*chunk_len + t of the
        # nn.Linear weight becomes w3[l, t, :], so the kernel's per-lead
        # contraction reproduces the chunking permute exactly.
        self.w3 = weight.reshape(num_lead, chunk_len, d_model).astype(compute_dtype)
        self.b2 = bias.reshape(1, d_model)      # bias stays f32 (added post-accum)
        self.weight_f32 = weight                # unpadded copies for reference check
        self.bias_f32 = bias

    def __call__(self, x):
        """x: (batch, num_lead, seqlen) -> (batch, num_chunks, d_model)."""
        assert x.shape[1] == self.num_lead
        assert x.shape[2] % self.chunk_len == 0
        return linear_embed_forward(x, self.w3, self.b2,
                                    compute_dtype=self.compute_dtype,
                                    out_dtype=jnp.float32)


if __name__ == "__main__":
    key = jax.random.PRNGKey(0)
    k_param, k_x = jax.random.split(key)

    # Small shapes consistent with the module's forward.
    batch, num_lead, seqlen = 2, 4, 16
    chunk_len, d_model = 8, 32          # -> num_chunks = 2, chunk_dim = 32

    x = jax.random.normal(k_x, (batch, num_lead, seqlen), jnp.float32)

    # Pure-JAX reference of the same semantics.
    num_chunks = seqlen // chunk_len
    xr = x.reshape(batch, num_lead, num_chunks, chunk_len)
    xr = jnp.transpose(xr, (0, 2, 1, 3)).reshape(batch, num_chunks, -1)

    # Default f32 path: matches the PyTorch module's numerics.
    module = LinearEmbed(num_lead, chunk_len, d_model, k_param)
    feat = jax.block_until_ready(module(x))
    ref = xr @ module.weight_f32 + module.bias_f32
    assert feat.shape == (batch, num_chunks, d_model)
    assert jnp.allclose(feat, ref, atol=1e-5, rtol=1e-5)

    # Optional bf16 MXU operand path (f32 accumulation); valid on v5e/v6e/v7x.
    module_bf16 = LinearEmbed(num_lead, chunk_len, d_model, k_param,
                              compute_dtype=jnp.bfloat16)
    feat_bf16 = jax.block_until_ready(module_bf16(x))
    assert jnp.allclose(feat_bf16, ref, atol=2e-2, rtol=2e-2)

    print("KERNEL_OK")
</pallas_src>

<mosaic_0001>
module attributes {stable_mosaic.version = 11 : i64} {
  func.func @kernel(%arg0: i32, %arg1: i32, %arg2: memref<1x4x2x8xf32, #tpu.memory_space<vmem>>, %arg3: memref<4x8x32xf32, #tpu.memory_space<vmem>>, %arg4: memref<1x32xf32, #tpu.memory_space<vmem>>, %arg5: memref<1x2x32xf32, #tpu.memory_space<vmem>>) attributes {dimension_semantics = [#tpu.dimension_semantics<parallel>, #tpu.dimension_semantics<parallel>], iteration_bounds = array<i64: 2, 1>, scalar_prefetch = 0 : i64, scratch_operands = 0 : i64, tpu.core_type = #tpu.core_type<tc>, window_params = [{transform_indices = @transform_0, window_bounds = array<i64: 1, 4, 2, 8>}, {pipeline_mode = #tpu.pipeline_mode<synchronous>, transform_indices = @transform_1, window_bounds = array<i64: 4, 8, 32>}, {pipeline_mode = #tpu.pipeline_mode<synchronous>, transform_indices = @transform_2, window_bounds = array<i64: 1, 32>}, {transform_indices = @transform_3, window_bounds = array<i64: 1, 2, 32>}]} {
    %c0 = arith.constant 0 : index
    %c0_0 = arith.constant 0 : index
    %c0_1 = arith.constant 0 : index
    %c0_2 = arith.constant 0 : index
    %0 = vector.load %arg2[%c0, %c0_0, %c0_1, %c0_2] : memref<1x4x2x8xf32, #tpu.memory_space<vmem>>, vector<1x1x2x8xf32>
    %1 = vector.shape_cast %0 : vector<1x1x2x8xf32> to vector<2x8xf32>
    %c0_3 = arith.constant 0 : index
    %c0_4 = arith.constant 0 : index
    %c0_5 = arith.constant 0 : index
    %2 = vector.load %arg3[%c0_3, %c0_4, %c0_5] : memref<4x8x32xf32, #tpu.memory_space<vmem>>, vector<1x8x32xf32>
    %3 = vector.shape_cast %2 : vector<1x8x32xf32> to vector<8x32xf32>
    %cst = arith.constant dense<0.000000e+00> : vector<2x32xf32>
    %4 = tpu.matmul %1, %3, %cst {dimension_numbers = #tpu.dot_dimension_numbers<[1], [0], [0], [1], [0, 0, 1, 1], [], []>} : vector<2x8xf32>, vector<8x32xf32>, vector<2x32xf32> -> vector<2x32xf32>
    %c0_6 = arith.constant 0 : index
    %c1 = arith.constant 1 : index
    %c0_7 = arith.constant 0 : index
    %c0_8 = arith.constant 0 : index
    %5 = vector.load %arg2[%c0_6, %c1, %c0_7, %c0_8] : memref<1x4x2x8xf32, #tpu.memory_space<vmem>>, vector<1x1x2x8xf32>
    %6 = vector.shape_cast %5 : vector<1x1x2x8xf32> to vector<2x8xf32>
    %c1_9 = arith.constant 1 : index
    %c0_10 = arith.constant 0 : index
    %c0_11 = arith.constant 0 : index
    %7 = vector.load %arg3[%c1_9, %c0_10, %c0_11] : memref<4x8x32xf32, #tpu.memory_space<vmem>>, vector<1x8x32xf32>
    %8 = vector.shape_cast %7 : vector<1x8x32xf32> to vector<8x32xf32>
    %cst_12 = arith.constant dense<0.000000e+00> : vector<2x32xf32>
    %9 = tpu.matmul %6, %8, %cst_12 {dimension_numbers = #tpu.dot_dimension_numbers<[1], [0], [0], [1], [0, 0, 1, 1], [], []>} : vector<2x8xf32>, vector<8x32xf32>, vector<2x32xf32> -> vector<2x32xf32>
    %10 = arith.addf %4, %9 : vector<2x32xf32>
    %c0_13 = arith.constant 0 : index
    %c2 = arith.constant 2 : index
    %c0_14 = arith.constant 0 : index
    %c0_15 = arith.constant 0 : index
    %11 = vector.load %arg2[%c0_13, %c2, %c0_14, %c0_15] : memref<1x4x2x8xf32, #tpu.memory_space<vmem>>, vector<1x1x2x8xf32>
    %12 = vector.shape_cast %11 : vector<1x1x2x8xf32> to vector<2x8xf32>
    %c2_16 = arith.constant 2 : index
    %c0_17 = arith.constant 0 : index
    %c0_18 = arith.constant 0 : index
    %13 = vector.load %arg3[%c2_16, %c0_17, %c0_18] : memref<4x8x32xf32, #tpu.memory_space<vmem>>, vector<1x8x32xf32>
    %14 = vector.shape_cast %13 : vector<1x8x32xf32> to vector<8x32xf32>
    %cst_19 = arith.constant dense<0.000000e+00> : vector<2x32xf32>
    %15 = tpu.matmul %12, %14, %cst_19 {dimension_numbers = #tpu.dot_dimension_numbers<[1], [0], [0], [1], [0, 0, 1, 1], [], []>} : vector<2x8xf32>, vector<8x32xf32>, vector<2x32xf32> -> vector<2x32xf32>
    %16 = arith.addf %10, %15 : vector<2x32xf32>
    %c0_20 = arith.constant 0 : index
    %c3 = arith.constant 3 : index
    %c0_21 = arith.constant 0 : index
    %c0_22 = arith.constant 0 : index
    %17 = vector.load %arg2[%c0_20, %c3, %c0_21, %c0_22] : memref<1x4x2x8xf32, #tpu.memory_space<vmem>>, vector<1x1x2x8xf32>
    %18 = vector.shape_cast %17 : vector<1x1x2x8xf32> to vector<2x8xf32>
    %c3_23 = arith.constant 3 : index
    %c0_24 = arith.constant 0 : index
    %c0_25 = arith.constant 0 : index
    %19 = vector.load %arg3[%c3_23, %c0_24, %c0_25] : memref<4x8x32xf32, #tpu.memory_space<vmem>>, vector<1x8x32xf32>
    %20 = vector.shape_cast %19 : vector<1x8x32xf32> to vector<8x32xf32>
    %cst_26 = arith.constant dense<0.000000e+00> : vector<2x32xf32>
    %21 = tpu.matmul %18, %20, %cst_26 {dimension_numbers = #tpu.dot_dimension_numbers<[1], [0], [0], [1], [0, 0, 1, 1], [], []>} : vector<2x8xf32>, vector<8x32xf32>, vector<2x32xf32> -> vector<2x32xf32>
    %22 = arith.addf %16, %21 : vector<2x32xf32>
    %c0_27 = arith.constant 0 : index
    %c0_28 = arith.constant 0 : index
    %23 = vector.load %arg4[%c0_27, %c0_28] : memref<1x32xf32, #tpu.memory_space<vmem>>, vector<1x32xf32>
    %24 = vector.broadcast %23 : vector<1x32xf32> to vector<2x32xf32>
    %25 = arith.addf %22, %24 : vector<2x32xf32>
    %c0_29 = arith.constant 0 : index
    %c0_30 = arith.constant 0 : index
    %c0_31 = arith.constant 0 : index
    %26 = vector.load %arg5[%c0_29, %c0_30, %c0_31] : memref<1x2x32xf32, #tpu.memory_space<vmem>>, vector<1x2x32xf32>
    %27 = vector.shape_cast %26 : vector<1x2x32xf32> to vector<2x32xf32>
    %28 = vector.shape_cast %25 : vector<2x32xf32> to vector<1x2x32xf32>
    tpu.vector_store %arg5[%c0_29, %c0_30, %c0_31], %28 {strides = array<i32>} : memref<1x2x32xf32, #tpu.memory_space<vmem>>, vector<1x2x32xf32>,
    return
  }
  func.func @transform_0(%arg0: i32, %arg1: i32) -> (i32, i32, i32, i32) {
    %c0_i32 = arith.constant 0 : i32
    %c0_i32_0 = arith.constant 0 : i32
    %c0_i32_1 = arith.constant 0 : i32
    return %arg0, %c0_i32, %arg1, %c0_i32_0 : i32, i32, i32, i32
  }
  func.func @transform_1(%arg0: i32, %arg1: i32) -> (i32, i32, i32) {
    %c0_i32 = arith.constant 0 : i32
    %c0_i32_0 = arith.constant 0 : i32
    %c0_i32_1 = arith.constant 0 : i32
    %c0_i32_2 = arith.constant 0 : i32
    return %c0_i32, %c0_i32_0, %c0_i32_1 : i32, i32, i32
  }
  func.func @transform_2(%arg0: i32, %arg1: i32) -> (i32, i32) {
    %c0_i32 = arith.constant 0 : i32
    %c0_i32_0 = arith.constant 0 : i32
    %c0_i32_1 = arith.constant 0 : i32
    return %c0_i32, %c0_i32_0 : i32, i32
  }
  func.func @transform_3(%arg0: i32, %arg1: i32) -> (i32, i32, i32) {
    %c0_i32 = arith.constant 0 : i32
    %c0_i32_0 = arith.constant 0 : i32
    return %arg0, %arg1, %c0_i32 : i32, i32, i32
  }
}

</mosaic_0001>

<llo_original>
// kernel: linear_embed_forward.1
$region0: #{linear_embed_forward.1}
  #allocation0 [shape = 'u32[]', space=smem, size = 0x4, offset = 0x4, fixed_abs, tag = 'smem constant byte address 0x4 - core index']
  #allocation1 [shape = 'u32[144,128]{1,0:T(1,128)}', space=vmem, size = 0x12000, scoped, tag = 'internal scratch']
  %s0 = inlined_call_operand.vmem [shape: f32[2,4,2,8], index: 0, kind: input, shape index: {}]
  %s1 = inlined_call_operand.hbm [shape: f32[4,8,32], index: 1, kind: input, shape index: {}]
  %s2 = inlined_call_operand.vmem [shape: f32[1,32], index: 2, kind: input, shape index: {}]
  %s3 = inlined_call_operand.hbm [shape: f32[2,2,32], index: 3, kind: output, shape index: {}]
  %s4 = sld [smem:[#allocation0]]
  $region49: #{linear_embed_forward.1} parent=0
    _
  %s6 = ssub.s32 1, %s4
  %s7 = scalar_select 0, %s6, %s4
  $region1: #{linear_embed_forward.1} parent=0
    #allocation2 [shape = 'u8[16384]{0}', space=vmem, size = 0x4000, scoped, tag = 'input window, operand 1, single buffered']
    #allocation3 [shape = 's32[2]{0}', space=sflag, size = 0x8, scoped, tag = 'scoped memory for linear_embed_forward.1']
    #allocation4 [shape = 's32[2]{0}', space=sflag, size = 0x8, scoped, tag = 'scoped memory for linear_embed_forward.1']
    #allocation5 [shape = 'u8[2048]{0}', space=vmem, size = 0x800, scoped, tag = 'output window, operand 0']
    %8 = vsyncpa [#allocation3], 0
    %9 = vsyncpa [#allocation4], 0
    %s10 = scalar_lea.sflag [#allocation4], 1
    %11 = vsyncpa %s10, 0
    loop: start=0, step=1, limit=4
    $region2: #{linear_embed_forward.1} parent=1 // loop_pre_header
      _
    $region3: #{linear_embed_forward.1} parent=1 // loop_header
      %s13 = sphi 0, %s17
      %p14 = scmp.ge.s32.totalorder %s13, 4
      %s20 = sphi 0, %s32
      %s21 = sphi 0, %s28
      %s22 = sphi 0, %s20
      %s23 = sphi 0, %s21
      %s24 = sphi 0, %s22
      %s25 = sphi 0, %s23
      %s37 = sphi 0, %s39
      %s40 = sphi 0, %s37
      %s41 = sphi 0, %s40
      %s57 = sphi 0, %s41
      %s61 = sphi 0, %s61
      %s63 = sphi 0, %s61
      %s64 = sphi 0, %s63
      %s78 = sphi 0, %s64
      %s82 = sphi 0, %s82
      %s84 = sphi 0, %s82
      %s85 = sphi 0, %s84
      %s99 = sphi 0, %s85
      %s107 = sphi 0, %s109
      %s110 = sphi 0, %s107
      %s111 = sphi 0, %s110
      %s127 = sphi 0, %s111
    $region4: #{linear_embed_forward.1} parent=1 // loop_header_branch
      %16 = sbr.rel (%p14) target = $region8
    $region5: #{linear_embed_forward.1} parent=1 // loop_body
      %s18 = ssub.s32 %s13, 1
      %s19 = ssub.s32 %s13, 2
      %s26 = sadd.s32 1, %s21
      %p27 = scmp.ge.s32.totalorder %s26, 1
      %s28 = scalar_select %p27, 0, %s26
      %s29 = sadd.s32 1, %s20
      %s30 = scalar_select %p27, %s29, %s20
      %p31 = scmp.ge.s32.totalorder %s30, 2
      %s32 = scalar_select %p31, 0, %s30
      %s33 = ssub.s32 %s20, %s32
      %s34 = ssub.s32 %s21, %s28
      %s35 = sor.u32 %s33, %s34
      %p36 = scmp.eq.s32.totalorder %s35, 0
      %s38 = sadd.s32 %s37, 1
      %s39 = scalar_select %p36, %s37, %s38
      %p42 = pneg %p36
      %p43 = scmp.eq.s32.totalorder %s13, 1
      %p44 = por %p42, %p43
      %p45 = scmp.ne.s32.totalorder %s37, %s40
      %p46 = scmp.eq.s32.totalorder %s13, 0
      %p47 = por %p45, %p46
      %p48 = scmp.ne.s32.totalorder %s37, %s40
      %p49 = scmp.eq.s32.totalorder %s18, 1
      %p50 = por %p48, %p49
      %p51 = scmp.ne.s32.totalorder %s40, %s41
      %p52 = scmp.eq.s32.totalorder %s18, 0
      %p53 = por %p51, %p52
      %p54 = scmp.ne.s32.totalorder %s40, %s41
      %p55 = scmp.eq.s32.totalorder %s19, 1
      %p56 = por %p54, %p55
      %p58 = scmp.ne.s32.totalorder %s41, %s57
      %p59 = scmp.eq.s32.totalorder %s19, 0
      %p60 = por %p58, %p59
      %s62 = sadd.s32 %s61, 1
      %p65 = scmp.eq.s32.totalorder %s13, 1
      %p66 = scmp.ne.s32.totalorder %s61, %s63
      %p67 = scmp.eq.s32.totalorder %s13, 0
      %p68 = por %p66, %p67
      %p69 = scmp.ne.s32.totalorder %s61, %s63
      %p70 = scmp.eq.s32.totalorder %s18, 1
      %p71 = por %p69, %p70
      %p72 = scmp.ne.s32.totalorder %s63, %s64
      %p73 = scmp.eq.s32.totalorder %s18, 0
      %p74 = por %p72, %p73
      %p75 = scmp.ne.s32.totalorder %s63, %s64
      %p76 = scmp.eq.s32.totalorder %s19, 1
      %p77 = por %p75, %p76
      %p79 = scmp.ne.s32.totalorder %s64, %s78
      %p80 = scmp.eq.s32.totalorder %s19, 0
      %p81 = por %p79, %p80
      %s83 = sadd.s32 %s82, 1
      %p86 = scmp.eq.s32.totalorder %s13, 1
      %p87 = scmp.ne.s32.totalorder %s82, %s84
      %p88 = scmp.eq.s32.totalorder %s13, 0
      %p89 = por %p87, %p88
      %p90 = scmp.ne.s32.totalorder %s82, %s84
      %p91 = scmp.eq.s32.totalorder %s18, 1
      %p92 = por %p90, %p91
      %p93 = scmp.ne.s32.totalorder %s84, %s85
      %p94 = scmp.eq.s32.totalorder %s18, 0
      %p95 = por %p93, %p94
      %p96 = scmp.ne.s32.totalorder %s84, %s85
      %p97 = scmp.eq.s32.totalorder %s19, 1
      %p98 = por %p96, %p97
      %p100 = scmp.ne.s32.totalorder %s85, %s99
      %p101 = scmp.eq.s32.totalorder %s19, 0
      %p102 = por %p100, %p101
      %s103 = ssub.s32 %s20, %s32
      %s104 = ssub.s32 %s21, %s28
      %s105 = sor.u32 %s103, %s104
      %p106 = scmp.eq.s32.totalorder %s105, 0
      %s108 = sadd.s32 %s107, 1
      %s109 = scalar_select %p106, %s107, %s108
      %p112 = pneg %p106
      %p113 = scmp.eq.s32.totalorder %s13, 1
      %p114 = por %p112, %p113
      %p115 = scmp.ne.s32.totalorder %s107, %s110
      %p116 = scmp.eq.s32.totalorder %s13, 0
      %p117 = por %p115, %p116
      %p118 = scmp.ne.s32.totalorder %s107, %s110
      %p119 = scmp.eq.s32.totalorder %s18, 1
      %p120 = por %p118, %p119
      %p121 = scmp.ne.s32.totalorder %s110, %s111
      %p122 = scmp.eq.s32.totalorder %s18, 0
      %p123 = por %p121, %p122
      %p124 = scmp.ne.s32.totalorder %s110, %s111
      %p125 = scmp.eq.s32.totalorder %s19, 1
      %p126 = por %p124, %p125
      %p128 = scmp.ne.s32.totalorder %s111, %s127
      %p129 = scmp.eq.s32.totalorder %s19, 0
      %p130 = por %p128, %p129
      %p131 = scmp.le.s32.totalorder 1, %s13
      %p132 = scmp.lt.s32.totalorder %s13, 3
      %p133 = pnand %p131, %p132
      %p134 = pneg %p133
      // Predicated region
      $region9: #{linear_embed_forward.1} parent=5 // pred_check
        _
      $region10: #{linear_embed_forward.1} parent=5 // pred_check_branch
        %136 = sbr.rel (%p133) target = $region12
      $region11: #{linear_embed_forward.1} parent=5 // pred_region
        %s137 = ssub.s32 %s13, 1
        // Predicated region
        $region13: #{linear_embed_forward.1} parent=11 // pred_check
          %p138 = pneg %p74
        $region14: #{linear_embed_forward.1} parent=11 // pred_check_branch
          %140 = sbr.rel (%p138) target = $region16
        $region15: #{linear_embed_forward.1} parent=11 // pred_region
          %s142 = ssub.s32 512, 512
          %143 = vsyncadd [#allocation3], %s142
          %s144 = sshll.u32 [#allocation2], 4
          %s145 = int_to_ptr.vmem [resolvable:$true] %s144
          %150 = dma.hbm_to_vmem [thread:$0]  %s1, 512, %s145, [#allocation3], 128, 128, 8
        $region16: #{linear_embed_forward.1} parent=11 // pred_fallthru
          _
        // Predicated region
        $region17: #{linear_embed_forward.1} parent=11 // pred_check
          %p151 = pneg %p95
        $region18: #{linear_embed_forward.1} parent=11 // pred_check_branch
          %153 = sbr.rel (%p151) target = $region20
        $region19: #{linear_embed_forward.1} parent=11 // pred_region
          _
        $region20: #{linear_embed_forward.1} parent=11 // pred_fallthru
          _
      $region12: #{linear_embed_forward.1} parent=5 // pred_fallthru
        _
      %p154 = scmp.lt.s32.totalorder %s13, 2
      // Predicated region
      $region21: #{linear_embed_forward.1} parent=5 // pred_check
        %p155 = pneg %p154
      $region22: #{linear_embed_forward.1} parent=5 // pred_check_branch
        %157 = sbr.rel (%p155) target = $region24
      $region23: #{linear_embed_forward.1} parent=5 // pred_region
        // Predicated region
        $region25: #{linear_embed_forward.1} parent=23 // pred_check
          %p158 = pneg %p47
        $region26: #{linear_embed_forward.1} parent=23 // pred_check_branch
          %160 = sbr.rel (%p158) target = $region28
        $region27: #{linear_embed_forward.1} parent=23 // pred_region
          %p161 = scmp.lt.s32.totalorder %s20, 1
          %s162 = scalar_select %p161, %s20, 1
          %p163 = scmp.lt.s32.totalorder %s21, 0
          %s164 = scalar_select %p163, %s21, 0
          %s165 = smul.addr %s162, 4
          %s166 = sadd.s32 %s164, %s165
          %s167 = smul.addr %s166, 2
          %s168 = scalar_lea.vmem %s0, %s167
        $region28: #{linear_embed_forward.1} parent=23 // pred_fallthru
          _
      $region24: #{linear_embed_forward.1} parent=5 // pred_fallthru
        _
      %p169 = scmp.le.s32.totalorder 1, %s13
      %p170 = scmp.lt.s32.totalorder %s13, 3
      %p171 = pnand %p169, %p170
      %p172 = pneg %p171
      // Predicated region
      $region29: #{linear_embed_forward.1} parent=5 // pred_check
        _
      $region30: #{linear_embed_forward.1} parent=5 // pred_check_branch
        %174 = sbr.rel (%p171) target = $region32
      $region31: #{linear_embed_forward.1} parent=5 // pred_region
        %s175 = ssub.s32 %s13, 1
        // Predicated region
        $region33: #{linear_embed_forward.1} parent=31 // pred_check
          %p176 = pneg %p74
        $region34: #{linear_embed_forward.1} parent=31 // pred_check_branch
          %178 = sbr.rel (%p176) target = $region36
        $region35: #{linear_embed_forward.1} parent=31 // pred_region
          %179 = dma.done [#allocation3], 512
        $region36: #{linear_embed_forward.1} parent=31 // pred_fallthru
          _
        %p180 = scmp.lt.s32.totalorder %s22, 1
        %s181 = scalar_select %p180, %s22, 1
        %p182 = scmp.lt.s32.totalorder %s23, 0
        %s183 = scalar_select %p182, %s23, 0
        %s184 = smul.addr %s181, 4
        %s185 = sadd.s32 %s183, %s184
        %s186 = smul.addr %s185, 2
        %s187 = scalar_lea.vmem %s0, %s186
        %p188 = pneg %p53
        %p189 = pneg %p50
        %p190 = pneg %p74
        %p191 = pneg %p71
        %p192 = pneg %p95
        %p193 = pneg %p92
        %p194 = pneg %p123
        %p195 = pneg %p120
        %s196 = sand.u32 %s110, 1
        %s197 = scalar_lea.sflag [#allocation4], %s196
        %s198 = sand.u32 %s110, 1
        %s199 = smul.addr %s198, 2
        %s200 = scalar_lea.vmem [#allocation5], %s199
        %p201 = scmp.lt.s32.totalorder %s22, 1
        %s202 = scalar_select %p201, %s22, 1
        %p203 = scmp.lt.s32.totalorder %s23, 0
        %s204 = scalar_select %p203, %s23, 0
        %s205 = smul.addr %s202, 4
        %s206 = sadd.s32 %s204, %s205
        %s207 = smul.addr %s206, 2
        %s208 = scalar_lea.vmem %s0, %s207
        %v209 = vld [vmem:[%s208] sm:$0x3]
        %v210 = vld [vmem:[#allocation2] sm:$0xff]
        %s211 = scalar_lea.vmem %s208, 2
        %v212 = vld [vmem:[%s211] sm:$0x3]
        %s213 = scalar_lea.vmem [#allocation2], 8
        %v214 = vld [vmem:[%s213] sm:$0xff]
        %vm215 = vcmask 64512
        %v217 = vsel %vm215, %v212, 0
        %219 = vmatprep.subr.mxu0 0.0
        %220 = vmatpush1.msra.mxu0 %v214
        %221 = vmatprep.subr.mxu0 0.0
        %222 = vmatpush1.msra.mxu0 0.0
        %223 = vmatprep.subr.mxu0 0.0
        %224 = vmatpush1.msra.mxu0 0.0
        %225 = vmatprep.subr.mxu0 0.0
        %226 = vmatpush1.msra.mxu0 0.0
        %227 = vmatprep.subr.mxu0 0.0
        %228 = vmatpush1.msra.mxu0 0.0
        %229 = vmatprep.subr.mxu0 0.0
        %230 = vmatpush1.msra.mxu0 0.0
        %231 = vmatprep.subr.mxu0 0.0
        %232 = vmatpush1.msra.mxu0 0.0
        %233 = vmatprep.subr.mxu0 0.0
        %234 = vmatpush1.msra.mxu0 0.0
        %235 = vmatprep.subr.mxu0 0.0
        %236 = vmatpush1.msra.mxu0 0.0
        %237 = vmatprep.subr.mxu0 0.0
        %238 = vmatpush1.msra.mxu0 0.0
        %239 = vmatprep.subr.mxu0 0.0
        %240 = vmatpush1.msra.mxu0 0.0
        %241 = vmatprep.subr.mxu0 0.0
        %242 = vmatpush1.msra.mxu0 0.0
        %243 = vmatprep.subr.mxu0 0.0
        %244 = vmatpush1.msra.mxu0 0.0
        %245 = vmatprep.subr.mxu0 0.0
        %246 = vmatpush1.msra.mxu0 0.0
        %247 = vmatprep.subr.mxu0 0.0
        %248 = vmatpush1.msra.mxu0 0.0
        %249 = vmatprep.subr.mxu0 0.0
        %250 = vmatpush1.msra.mxu0 0.0
        %251 = vmatprep.subr.mxu0 0.0
        %252 = vmatpush1.msra.mxu0 0.0
        %253 = vmatprep.subr.mxu0 0.0
        %254 = vmatpush1.msra.mxu0 0.0
        %255 = vmatprep.subr.mxu0 0.0
        %256 = vmatpush1.msra.mxu0 0.0
        %257 = vmatprep.subr.mxu0 0.0
        %258 = vmatpush1.msra.mxu0 0.0
        %259 = vmatprep.subr.mxu0 0.0
        %260 = vmatpush1.msra.mxu0 0.0
        %261 = vmatprep.subr.mxu0 0.0
        %262 = vmatpush1.msra.mxu0 0.0
        %263 = vmatprep.subr.mxu0 0.0
        %264 = vmatpush1.msra.mxu0 0.0
        %265 = vmatprep.subr.mxu0 0.0
        %266 = vmatpush1.msra.mxu0 0.0
        %267 = vmatprep.subr.mxu0 0.0
        %268 = vmatpush1.msra.mxu0 0.0
        %269 = vmatprep.subr.mxu0 0.0
        %270 = vmatpush1.msra.mxu0 0.0
        %271 = vmatprep.subr.mxu0 0.0
        %272 = vmatpush1.msra.mxu0 0.0
        %273 = vmatprep.subr.mxu0 0.0
        %274 = vmatpush1.msra.mxu0 0.0
        %275 = vmatprep.subr.mxu0 0.0
        %276 = vmatpush1.msra.mxu0 0.0
        %277 = vmatprep.subr.mxu0 0.0
        %278 = vmatpush1.msra.mxu0 0.0
        %279 = vmatprep.subr.mxu0 0.0
        %280 = vmatpush1.msra.mxu0 0.0
        %281 = vmatprep.subr.mxu0 0.0
        %282 = vmatpush1.msra.mxu0 0.0
        %283 = vmatprep.mubr.f32.mxu0 0.0
        %284 = vmatmul.mubr.f32.gmra.mrb[0].mxu0 %v217
        %v285 = vpop.f32.mrb[0].mxu0
        %v286 = vadd.f32 0.0, %v285
        %v287 = vpop.f32.mrb[0].mxu0
        %288 = vdwg.mxu0
        %v290 = vsel %vm215, %v209, 0
        %292 = vmatprep.subr.mxu0 0.0
        %293 = vmatpush1.msra.mxu0 %v210
        %294 = vmatprep.subr.mxu0 0.0
        %295 = vmatpush1.msra.mxu0 0.0
        %296 = vmatprep.subr.mxu0 0.0
        %297 = vmatpush1.msra.mxu0 0.0
        %298 = vmatprep.subr.mxu0 0.0
        %299 = vmatpush1.msra.mxu0 0.0
        %300 = vmatprep.subr.mxu0 0.0
        %301 = vmatpush1.msra.mxu0 0.0
        %302 = vmatprep.subr.mxu0 0.0
        %303 = vmatpush1.msra.mxu0 0.0
        %304 = vmatprep.subr.mxu0 0.0
        %305 = vmatpush1.msra.mxu0 0.0
        %306 = vmatprep.subr.mxu0 0.0
        %307 = vmatpush1.msra.mxu0 0.0
        %308 = vmatprep.subr.mxu0 0.0
        %309 = vmatpush1.msra.mxu0 0.0
        %310 = vmatprep.subr.mxu0 0.0
        %311 = vmatpush1.msra.mxu0 0.0
        %312 = vmatprep.subr.mxu0 0.0
        %313 = vmatpush1.msra.mxu0 0.0
        %314 = vmatprep.subr.mxu0 0.0
        %315 = vmatpush1.msra.mxu0 0.0
        %316 = vmatprep.subr.mxu0 0.0
        %317 = vmatpush1.msra.mxu0 0.0
        %318 = vmatprep.subr.mxu0 0.0
        %319 = vmatpush1.msra.mxu0 0.0
        %320 = vmatprep.subr.mxu0 0.0
        %321 = vmatpush1.msra.mxu0 0.0
        %322 = vmatprep.subr.mxu0 0.0
        %323 = vmatpush1.msra.mxu0 0.0
        %324 = vmatprep.subr.mxu0 0.0
        %325 = vmatpush1.msra.mxu0 0.0
        %326 = vmatprep.subr.mxu0 0.0
        %327 = vmatpush1.msra.mxu0 0.0
        %328 = vmatprep.subr.mxu0 0.0
        %329 = vmatpush1.msra.mxu0 0.0
        %330 = vmatprep.subr.mxu0 0.0
        %331 = vmatpush1.msra.mxu0 0.0
        %332 = vmatprep.subr.mxu0 0.0
        %333 = vmatpush1.msra.mxu0 0.0
        %334 = vmatprep.subr.mxu0 0.0
        %335 = vmatpush1.msra.mxu0 0.0
        %336 = vmatprep.subr.mxu0 0.0
        %337 = vmatpush1.msra.mxu0 0.0
        %338 = vmatprep.subr.mxu0 0.0
        %339 = vmatpush1.msra.mxu0 0.0
        %340 = vmatprep.subr.mxu0 0.0
        %341 = vmatpush1.msra.mxu0 0.0
        %342 = vmatprep.subr.mxu0 0.0
        %343 = vmatpush1.msra.mxu0 0.0
        %344 = vmatprep.subr.mxu0 0.0
        %345 = vmatpush1.msra.mxu0 0.0
        %346 = vmatprep.subr.mxu0 0.0
        %347 = vmatpush1.msra.mxu0 0.0
        %348 = vmatprep.subr.mxu0 0.0
        %349 = vmatpush1.msra.mxu0 0.0
        %350 = vmatprep.subr.mxu0 0.0
        %351 = vmatpush1.msra.mxu0 0.0
        %352 = vmatprep.subr.mxu0 0.0
        %353 = vmatpush1.msra.mxu0 0.0
        %354 = vmatprep.subr.mxu0 0.0
        %355 = vmatpush1.msra.mxu0 0.0
        %356 = vmatprep.mubr.f32.mxu0 0.0
        %357 = vmatmul.mubr.f32.gmra.mrb[0].mxu0 %v290
        %v358 = vpop.f32.mrb[0].mxu0
        %v359 = vadd.f32 %v286, %v358
        %v360 = vpop.f32.mrb[0].mxu0
        %361 = vdwg.mxu0
        %s362 = scalar_lea.vmem %s208, 4
        %v363 = vld [vmem:[%s362] sm:$0x3]
        %s364 = scalar_lea.vmem [#allocation2], 16
        %v365 = vld [vmem:[%s364] sm:$0xff]
        %v367 = vsel %vm215, %v363, 0
        %369 = vmatprep.subr.mxu0 0.0
        %370 = vmatpush1.msra.mxu0 %v365
        %371 = vmatprep.subr.mxu0 0.0
        %372 = vmatpush1.msra.mxu0 0.0
        %373 = vmatprep.subr.mxu0 0.0
        %374 = vmatpush1.msra.mxu0 0.0
        %375 = vmatprep.subr.mxu0 0.0
        %376 = vmatpush1.msra.mxu0 0.0
        %377 = vmatprep.subr.mxu0 0.0
        %378 = vmatpush1.msra.mxu0 0.0
        %379 = vmatprep.subr.mxu0 0.0
        %380 = vmatpush1.msra.mxu0 0.0
        %381 = vmatprep.subr.mxu0 0.0
        %382 = vmatpush1.msra.mxu0 0.0
        %383 = vmatprep.subr.mxu0 0.0
        %384 = vmatpush1.msra.mxu0 0.0
        %385 = vmatprep.subr.mxu0 0.0
        %386 = vmatpush1.msra.mxu0 0.0
        %387 = vmatprep.subr.mxu0 0.0
        %388 = vmatpush1.msra.mxu0 0.0
        %389 = vmatprep.subr.mxu0 0.0
        %390 = vmatpush1.msra.mxu0 0.0
        %391 = vmatprep.subr.mxu0 0.0
        %392 = vmatpush1.msra.mxu0 0.0
        %393 = vmatprep.subr.mxu0 0.0
        %394 = vmatpush1.msra.mxu0 0.0
        %395 = vmatprep.subr.mxu0 0.0
        %396 = vmatpush1.msra.mxu0 0.0
        %397 = vmatprep.subr.mxu0 0.0
        %398 = vmatpush1.msra.mxu0 0.0
        %399 = vmatprep.subr.mxu0 0.0
        %400 = vmatpush1.msra.mxu0 0.0
        %401 = vmatprep.subr.mxu0 0.0
        %402 = vmatpush1.msra.mxu0 0.0
        %403 = vmatprep.subr.mxu0 0.0
        %404 = vmatpush1.msra.mxu0 0.0
        %405 = vmatprep.subr.mxu0 0.0
        %406 = vmatpush1.msra.mxu0 0.0
        %407 = vmatprep.subr.mxu0 0.0
        %408 = vmatpush1.msra.mxu0 0.0
        %409 = vmatprep.subr.mxu0 0.0
        %410 = vmatpush1.msra.mxu0 0.0
        %411 = vmatprep.subr.mxu0 0.0
        %412 = vmatpush1.msra.mxu0 0.0
        %413 = vmatprep.subr.mxu0 0.0
        %414 = vmatpush1.msra.mxu0 0.0
        %415 = vmatprep.subr.mxu0 0.0
        %416 = vmatpush1.msra.mxu0 0.0
        %417 = vmatprep.subr.mxu0 0.0
        %418 = vmatpush1.msra.mxu0 0.0
        %419 = vmatprep.subr.mxu0 0.0
        %420 = vmatpush1.msra.mxu0 0.0
        %421 = vmatprep.subr.mxu0 0.0
        %422 = vmatpush1.msra.mxu0 0.0
        %423 = vmatprep.subr.mxu0 0.0
        %424 = vmatpush1.msra.mxu0 0.0
        %425 = vmatprep.subr.mxu0 0.0
        %426 = vmatpush1.msra.mxu0 0.0
        %427 = vmatprep.subr.mxu0 0.0
        %428 = vmatpush1.msra.mxu0 0.0
        %429 = vmatprep.subr.mxu0 0.0
        %430 = vmatpush1.msra.mxu0 0.0
        %431 = vmatprep.subr.mxu0 0.0
        %432 = vmatpush1.msra.mxu0 0.0
        %433 = vmatprep.mubr.f32.mxu0 0.0
        %434 = vmatmul.mubr.f32.gmra.mrb[0].mxu0 %v367
        %v435 = vpop.f32.mrb[0].mxu0
        %v436 = vadd.f32 0.0, %v435
        %v437 = vpop.f32.mrb[0].mxu0
        %438 = vdwg.mxu0
        %v439 = vadd.f32 %v359, %v436
        %s440 = scalar_lea.vmem %s208, 6
        %v441 = vld [vmem:[%s440] sm:$0x3]
        %s442 = scalar_lea.vmem [#allocation2], 24
        %v443 = vld [vmem:[%s442] sm:$0xff]
        %v445 = vsel %vm215, %v441, 0
        %447 = vmatprep.subr.mxu0 0.0
        %448 = vmatpush1.msra.mxu0 %v443
        %449 = vmatprep.subr.mxu0 0.0
        %450 = vmatpush1.msra.mxu0 0.0
        %451 = vmatprep.subr.mxu0 0.0
        %452 = vmatpush1.msra.mxu0 0.0
        %453 = vmatprep.subr.mxu0 0.0
        %454 = vmatpush1.msra.mxu0 0.0
        %455 = vmatprep.subr.mxu0 0.0
        %456 = vmatpush1.msra.mxu0 0.0
        %457 = vmatprep.subr.mxu0 0.0
        %458 = vmatpush1.msra.mxu0 0.0
        %459 = vmatprep.subr.mxu0 0.0
        %460 = vmatpush1.msra.mxu0 0.0
        %461 = vmatprep.subr.mxu0 0.0
        %462 = vmatpush1.msra.mxu0 0.0
        %463 = vmatprep.subr.mxu0 0.0
        %464 = vmatpush1.msra.mxu0 0.0
        %465 = vmatprep.subr.mxu0 0.0
        %466 = vmatpush1.msra.mxu0 0.0
        %467 = vmatprep.subr.mxu0 0.0
        %468 = vmatpush1.msra.mxu0 0.0
        %469 = vmatprep.subr.mxu0 0.0
        %470 = vmatpush1.msra.mxu0 0.0
        %471 = vmatprep.subr.mxu0 0.0
        %472 = vmatpush1.msra.mxu0 0.0
        %473 = vmatprep.subr.mxu0 0.0
        %474 = vmatpush1.msra.mxu0 0.0
        %475 = vmatprep.subr.mxu0 0.0
        %476 = vmatpush1.msra.mxu0 0.0
        %477 = vmatprep.subr.mxu0 0.0
        %478 = vmatpush1.msra.mxu0 0.0
        %479 = vmatprep.subr.mxu0 0.0
        %480 = vmatpush1.msra.mxu0 0.0
        %481 = vmatprep.subr.mxu0 0.0
        %482 = vmatpush1.msra.mxu0 0.0
        %483 = vmatprep.subr.mxu0 0.0
        %484 = vmatpush1.msra.mxu0 0.0
        %485 = vmatprep.subr.mxu0 0.0
        %486 = vmatpush1.msra.mxu0 0.0
        %487 = vmatprep.subr.mxu0 0.0
        %488 = vmatpush1.msra.mxu0 0.0
        %489 = vmatprep.subr.mxu0 0.0
        %490 = vmatpush1.msra.mxu0 0.0
        %491 = vmatprep.subr.mxu0 0.0
        %492 = vmatpush1.msra.mxu0 0.0
        %493 = vmatprep.subr.mxu0 0.0
        %494 = vmatpush1.msra.mxu0 0.0
        %495 = vmatprep.subr.mxu0 0.0
        %496 = vmatpush1.msra.mxu0 0.0
        %497 = vmatprep.subr.mxu0 0.0
        %498 = vmatpush1.msra.mxu0 0.0
        %499 = vmatprep.subr.mxu0 0.0
        %500 = vmatpush1.msra.mxu0 0.0
        %501 = vmatprep.subr.mxu0 0.0
        %502 = vmatpush1.msra.mxu0 0.0
        %503 = vmatprep.subr.mxu0 0.0
        %504 = vmatpush1.msra.mxu0 0.0
        %505 = vmatprep.subr.mxu0 0.0
        %506 = vmatpush1.msra.mxu0 0.0
        %507 = vmatprep.subr.mxu0 0.0
        %508 = vmatpush1.msra.mxu0 0.0
        %509 = vmatprep.subr.mxu0 0.0
        %510 = vmatpush1.msra.mxu0 0.0
        %511 = vmatprep.mubr.f32.mxu0 0.0
        %512 = vmatmul.mubr.f32.gmra.mrb[0].mxu0 %v445
        %v513 = vpop.f32.mrb[0].mxu0
        %v514 = vadd.f32 0.0, %v513
        %v515 = vpop.f32.mrb[0].mxu0
        %516 = vdwg.mxu0
        %v517 = vadd.f32 %v439, %v514
        %v518 = vld [vmem:[%s2] sm:$0x1]
        %v520 = vlaneseq
        %v521 = vshrl.u32 %v520, 7
        %v522 = vsub.s32 0, %v521
        %v523 = vrot.slane %v518, %v522
        %v525 = vadd.f32 %v517, %v523
        %vm526 = vcmask 254976
        %527 = vst.msk [vmem:[%s200] sm:$0x3] %vm526, %v525
        %s528 = sand.u32 %s110, 1
        %s529 = scalar_lea.sflag [#allocation4], %s528
        %s530 = sand.u32 %s110, 1
        %s531 = smul.addr %s530, 2
        %s532 = scalar_lea.vmem [#allocation5], %s531
        // Predicated region
        $region37: #{linear_embed_forward.1} parent=31 // pred_check
          %p533 = pneg %p120
        $region38: #{linear_embed_forward.1} parent=31 // pred_check_branch
          %535 = sbr.rel (%p533) target = $region40
        $region39: #{linear_embed_forward.1} parent=31 // pred_region
          %s537 = ssub.s32 32, 32
          %538 = vsyncadd %s529, %s537
          %s539 = sadd.s32 %s23, %s22
          %s540 = smul.addr %s539, 32
          %s541 = scalar_lea.hbm %s3, %s540
          %s543 = sshll.u32 %s532, 4
          %s544 = int_to_ptr.vmem [resolvable:$true] %s543
          %546 = dma.vmem_to_hbm [thread:$0]  %s544, 32, %s541, %s529
        $region40: #{linear_embed_forward.1} parent=31 // pred_fallthru
          _
      $region32: #{linear_embed_forward.1} parent=5 // pred_fallthru
        _
      %p547 = scmp.le.s32.totalorder 2, %s13
      // Predicated region
      $region41: #{linear_embed_forward.1} parent=5 // pred_check
        %p548 = pneg %p547
      $region42: #{linear_embed_forward.1} parent=5 // pred_check_branch
        %550 = sbr.rel (%p548) target = $region44
      $region43: #{linear_embed_forward.1} parent=5 // pred_region
        %s551 = ssub.s32 %s13, 2
        // Predicated region
        $region45: #{linear_embed_forward.1} parent=43 // pred_check
          %p552 = pneg %p126
        $region46: #{linear_embed_forward.1} parent=43 // pred_check_branch
          %554 = sbr.rel (%p552) target = $region48
        $region47: #{linear_embed_forward.1} parent=43 // pred_region
          %s555 = sand.u32 %s111, 1
          %s556 = scalar_lea.sflag [#allocation4], %s555
          %s557 = sand.u32 %s111, 1
          %s558 = smul.addr %s557, 2
          %s559 = scalar_lea.vmem [#allocation5], %s558
          %560 = dma.done %s556, 32
        $region48: #{linear_embed_forward.1} parent=43 // pred_fallthru
          _
      $region44: #{linear_embed_forward.1} parent=5 // pred_fallthru
        _
    $region6: #{linear_embed_forward.1} parent=1 // loop_footer
      %s17 = sadd.s32 1, %s13
    $region7: #{linear_embed_forward.1} parent=1 // loop_footer_branch
      %12 = sbr.rel target = $region3
    $region8: #{linear_embed_forward.1} parent=1 // loop_exit
      _
    %561 = vsyncpa [#allocation3], 1
    %s562 = scalar_lea.sflag [#allocation3], 1
    %563 = vsyncpa %s562, 1
    %564 = vsyncpa [#allocation4], 1
    %s565 = scalar_lea.sflag [#allocation4], 1
    %566 = vsyncpa %s565, 1

</llo_original>
